<compile_context>
chip_gen: v7x
topology: tpu7x:2x2x1
jax: 0.10.0
libtpu: 0.0.40
codegen_flags: <defaults>
</compile_context>

<pallas_src>
import functools

import jax
import jax.numpy as jnp
from jax.experimental import pallas as pl
from jax.experimental.pallas import tpu as pltpu

HIDDEN = 20
_N_ACC = 4         # independent partial accumulators (ILP for the 20-term reduction)
_CHUNK_ROWS = 8    # vreg-resident compute chunk: (8, block_cols) f32 = 4 vregs


def _round_up(v, m):
    return ((v + m - 1) // m) * m


def mlp_kernel(c_ref, d_ref, ab_ref, x_ref, o_ref):
    """c/d/ab are 1-D f32 SMEM refs; x_ref/o_ref are (block_rows, block_cols) VMEM tiles.

    Computes y = A*x + B + sum_j d[j] * |x + c[j]|  (== the original 1->20->1 ReLU MLP).
    The block is processed in (8, block_cols) chunks so accumulators stay in vregs
    instead of materializing block-sized VMEM temporaries.
    """
    # Hoist all scalar (SMEM) reads out of the chunk loop.
    a = ab_ref[0]
    b = ab_ref[1]
    cs = [c_ref[j] for j in range(HIDDEN)]
    ds = [d_ref[j] for j in range(HIDDEN)]

    n_chunks = x_ref.shape[0] // _CHUNK_ROWS  # static

    @pl.loop(0, n_chunks)
    def _(step):
        r0 = pl.multiple_of(step * _CHUNK_ROWS, _CHUNK_ROWS)
        xc = x_ref[pl.ds(r0, _CHUNK_ROWS), :]
        # Fold the affine part (A*x + B) into the first accumulator.
        accs = [xc * a + b] + [jnp.zeros_like(xc) for _ in range(_N_ACC - 1)]
        for j in range(HIDDEN):  # statically unrolled; 4 VPU ops / element / unit
            accs[j % _N_ACC] = accs[j % _N_ACC] + jnp.abs(xc + cs[j]) * ds[j]
        y = (accs[0] + accs[1]) + (accs[2] + accs[3])
        o_ref[pl.ds(r0, _CHUNK_ROWS), :] = y.astype(o_ref.dtype)


@functools.partial(jax.jit, static_argnames=("block_rows", "block_cols"))
def net_forward(x, w1, b1, w2, b2, *, block_rows=256, block_cols=512):
    """x: (N, 1) f32. w1: (20, 1), b1: (20,), w2: (1, 20), b2: (1,) — PyTorch layout."""
    assert block_rows % _CHUNK_ROWS == 0 and block_cols % 128 == 0
    n = x.shape[0]
    dtype = x.dtype

    # --- weight preprocessing (42 scalars; negligible, done once under jit) ---
    # w2*relu(w1*x + b1) == 0.5*w2*w1*x + 0.5*w2*b1 + 0.5*w2*|w1| * |x + b1/w1|
    # Units with w1 == 0 contribute the constant w2*relu(b1), folded into B.
    w1f = w1.reshape(-1).astype(jnp.float32)   # (20,)
    b1f = b1.reshape(-1).astype(jnp.float32)   # (20,)
    w2f = w2.reshape(-1).astype(jnp.float32)   # (20,)
    b2s = b2.reshape(-1).astype(jnp.float32)[0]
    nz = w1f != 0.0
    c = jnp.where(nz, b1f / jnp.where(nz, w1f, 1.0), 0.0)     # (20,)
    d = jnp.where(nz, 0.5 * w2f * jnp.abs(w1f), 0.0)          # (20,)
    a = 0.5 * jnp.sum(w2f * w1f)
    b = b2s + jnp.sum(jnp.where(nz, 0.5 * w2f * b1f, w2f * jnp.maximum(b1f, 0.0)))
    ab = jnp.stack([a, b])                                    # (2,)

    # --- lane-dense layout: flatten batch; shrink block for small N; pad only if needed ---
    rows_needed = pl.cdiv(n, block_cols)
    block_rows_eff = min(block_rows, _round_up(rows_needed, _CHUNK_ROWS))
    block_elems = block_rows_eff * block_cols
    n_pad = pl.cdiv(n, block_elems) * block_elems

    xf = x.reshape(-1)
    if n_pad != n:                       # ragged batch: pad up to whole blocks
        xf = jnp.pad(xf, (0, n_pad - n))
    x2 = xf.reshape(-1, block_cols)      # (rows, block_cols), rows % block_rows_eff == 0
    rows = x2.shape[0]
    grid = (rows // block_rows_eff,)

    smem = pl.BlockSpec(memory_space=pltpu.MemorySpace.SMEM)
    tile = pl.BlockSpec((block_rows_eff, block_cols), lambda i: (i, 0))

    out2 = pl.pallas_call(
        mlp_kernel,
        out_shape=jax.ShapeDtypeStruct((rows, block_cols), dtype),
        grid=grid,
        in_specs=[smem, smem, smem, tile],
        out_specs=tile,
        compiler_params=pltpu.CompilerParams(
            dimension_semantics=("parallel",),  # shard batch tiles across v7x's 2 TCs
        ),
    )(c, d, ab, x2)

    y = out2.reshape(-1)
    if n_pad != n:                       # strip padding only if we added any
        y = y[:n]
    return y.reshape(n, 1)


def init_params(key):
    """Deterministic init mirroring nn.Linear default (uniform +/- 1/sqrt(fan_in))."""
    k1, k2, k3, k4 = jax.random.split(key, 4)
    bound1 = 1.0  # 1/sqrt(1)
    w1 = jax.random.uniform(k1, (20, 1), jnp.float32, -bound1, bound1)
    b1 = jax.random.uniform(k2, (20,), jnp.float32, -bound1, bound1)
    bound2 = 1.0 / jnp.sqrt(20.0)
    w2 = jax.random.uniform(k3, (1, 20), jnp.float32, -bound2, bound2)
    b2 = jax.random.uniform(k4, (1,), jnp.float32, -bound2, bound2)
    return w1, b1, w2, b2


if __name__ == "__main__":
    key = jax.random.PRNGKey(0)
    kx, kp = jax.random.split(key)
    w1, b1, w2, b2 = init_params(kp)

    def ref(xv):  # plain-JAX reference (mirrors the PyTorch forward)
        h = jnp.maximum(xv @ w1.T + b1, 0.0)
        return h @ w2.T + b2

    # Case 1: ragged batch -> exercises padding, grid=3 pipeline, 4-chunk inner loop.
    n1 = 40000
    x1 = jax.random.normal(kx, (n1, 1), jnp.float32)
    y1 = jax.block_until_ready(net_forward(x1, w1, b1, w2, b2, block_rows=32))
    assert y1.shape == (n1, 1)
    assert jnp.allclose(y1, ref(x1), atol=1e-4, rtol=1e-4)

    # Case 2: exact block multiple -> zero-copy fast path (no pad, no output slice).
    n2 = 16384  # == 32 * 512
    x2 = jax.random.normal(kx, (n2, 1), jnp.float32)
    y2 = jax.block_until_ready(net_forward(x2, w1, b1, w2, b2))
    assert y2.shape == (n2, 1)
    assert jnp.allclose(y2, ref(x2), atol=1e-4, rtol=1e-4)

    print("KERNEL_OK")
</pallas_src>

<mosaic_0001>
module attributes {stable_mosaic.version = 11 : i64} {
  func.func @mlp_kernel(%arg0: i32, %arg1: memref<20xf32, #tpu.memory_space<smem>>, %arg2: memref<20xf32, #tpu.memory_space<smem>>, %arg3: memref<2xf32, #tpu.memory_space<smem>>, %arg4: memref<32x512xf32, #tpu.memory_space<vmem>>, %arg5: memref<32x512xf32, #tpu.memory_space<vmem>>) attributes {dimension_semantics = [#tpu.dimension_semantics<parallel>], iteration_bounds = array<i64: 3>, scalar_prefetch = 0 : i64, scratch_operands = 0 : i64, tpu.core_type = #tpu.core_type<tc>, window_params = [{transform_indices = @transform_0, window_bounds = array<i64: 20>}, {transform_indices = @transform_1, window_bounds = array<i64: 20>}, {transform_indices = @transform_2, window_bounds = array<i64: 2>}, {transform_indices = @transform_3, window_bounds = array<i64: 32, 512>}, {transform_indices = @transform_4, window_bounds = array<i64: 32, 512>}]} {
    %c0 = arith.constant 0 : index
    %0 = memref.load %arg3[%c0] : memref<2xf32, #tpu.memory_space<smem>>
    %c1 = arith.constant 1 : index
    %1 = memref.load %arg3[%c1] : memref<2xf32, #tpu.memory_space<smem>>
    %c0_0 = arith.constant 0 : index
    %2 = memref.load %arg1[%c0_0] : memref<20xf32, #tpu.memory_space<smem>>
    %c1_1 = arith.constant 1 : index
    %3 = memref.load %arg1[%c1_1] : memref<20xf32, #tpu.memory_space<smem>>
    %c2 = arith.constant 2 : index
    %4 = memref.load %arg1[%c2] : memref<20xf32, #tpu.memory_space<smem>>
    %c3 = arith.constant 3 : index
    %5 = memref.load %arg1[%c3] : memref<20xf32, #tpu.memory_space<smem>>
    %c4 = arith.constant 4 : index
    %6 = memref.load %arg1[%c4] : memref<20xf32, #tpu.memory_space<smem>>
    %c5 = arith.constant 5 : index
    %7 = memref.load %arg1[%c5] : memref<20xf32, #tpu.memory_space<smem>>
    %c6 = arith.constant 6 : index
    %8 = memref.load %arg1[%c6] : memref<20xf32, #tpu.memory_space<smem>>
    %c7 = arith.constant 7 : index
    %9 = memref.load %arg1[%c7] : memref<20xf32, #tpu.memory_space<smem>>
    %c8 = arith.constant 8 : index
    %10 = memref.load %arg1[%c8] : memref<20xf32, #tpu.memory_space<smem>>
    %c9 = arith.constant 9 : index
    %11 = memref.load %arg1[%c9] : memref<20xf32, #tpu.memory_space<smem>>
    %c10 = arith.constant 10 : index
    %12 = memref.load %arg1[%c10] : memref<20xf32, #tpu.memory_space<smem>>
    %c11 = arith.constant 11 : index
    %13 = memref.load %arg1[%c11] : memref<20xf32, #tpu.memory_space<smem>>
    %c12 = arith.constant 12 : index
    %14 = memref.load %arg1[%c12] : memref<20xf32, #tpu.memory_space<smem>>
    %c13 = arith.constant 13 : index
    %15 = memref.load %arg1[%c13] : memref<20xf32, #tpu.memory_space<smem>>
    %c14 = arith.constant 14 : index
    %16 = memref.load %arg1[%c14] : memref<20xf32, #tpu.memory_space<smem>>
    %c15 = arith.constant 15 : index
    %17 = memref.load %arg1[%c15] : memref<20xf32, #tpu.memory_space<smem>>
    %c16 = arith.constant 16 : index
    %18 = memref.load %arg1[%c16] : memref<20xf32, #tpu.memory_space<smem>>
    %c17 = arith.constant 17 : index
    %19 = memref.load %arg1[%c17] : memref<20xf32, #tpu.memory_space<smem>>
    %c18 = arith.constant 18 : index
    %20 = memref.load %arg1[%c18] : memref<20xf32, #tpu.memory_space<smem>>
    %c19 = arith.constant 19 : index
    %21 = memref.load %arg1[%c19] : memref<20xf32, #tpu.memory_space<smem>>
    %c0_2 = arith.constant 0 : index
    %22 = memref.load %arg2[%c0_2] : memref<20xf32, #tpu.memory_space<smem>>
    %c1_3 = arith.constant 1 : index
    %23 = memref.load %arg2[%c1_3] : memref<20xf32, #tpu.memory_space<smem>>
    %c2_4 = arith.constant 2 : index
    %24 = memref.load %arg2[%c2_4] : memref<20xf32, #tpu.memory_space<smem>>
    %c3_5 = arith.constant 3 : index
    %25 = memref.load %arg2[%c3_5] : memref<20xf32, #tpu.memory_space<smem>>
    %c4_6 = arith.constant 4 : index
    %26 = memref.load %arg2[%c4_6] : memref<20xf32, #tpu.memory_space<smem>>
    %c5_7 = arith.constant 5 : index
    %27 = memref.load %arg2[%c5_7] : memref<20xf32, #tpu.memory_space<smem>>
    %c6_8 = arith.constant 6 : index
    %28 = memref.load %arg2[%c6_8] : memref<20xf32, #tpu.memory_space<smem>>
    %c7_9 = arith.constant 7 : index
    %29 = memref.load %arg2[%c7_9] : memref<20xf32, #tpu.memory_space<smem>>
    %c8_10 = arith.constant 8 : index
    %30 = memref.load %arg2[%c8_10] : memref<20xf32, #tpu.memory_space<smem>>
    %c9_11 = arith.constant 9 : index
    %31 = memref.load %arg2[%c9_11] : memref<20xf32, #tpu.memory_space<smem>>
    %c10_12 = arith.constant 10 : index
    %32 = memref.load %arg2[%c10_12] : memref<20xf32, #tpu.memory_space<smem>>
    %c11_13 = arith.constant 11 : index
    %33 = memref.load %arg2[%c11_13] : memref<20xf32, #tpu.memory_space<smem>>
    %c12_14 = arith.constant 12 : index
    %34 = memref.load %arg2[%c12_14] : memref<20xf32, #tpu.memory_space<smem>>
    %c13_15 = arith.constant 13 : index
    %35 = memref.load %arg2[%c13_15] : memref<20xf32, #tpu.memory_space<smem>>
    %c14_16 = arith.constant 14 : index
    %36 = memref.load %arg2[%c14_16] : memref<20xf32, #tpu.memory_space<smem>>
    %c15_17 = arith.constant 15 : index
    %37 = memref.load %arg2[%c15_17] : memref<20xf32, #tpu.memory_space<smem>>
    %c16_18 = arith.constant 16 : index
    %38 = memref.load %arg2[%c16_18] : memref<20xf32, #tpu.memory_space<smem>>
    %c17_19 = arith.constant 17 : index
    %39 = memref.load %arg2[%c17_19] : memref<20xf32, #tpu.memory_space<smem>>
    %c18_20 = arith.constant 18 : index
    %40 = memref.load %arg2[%c18_20] : memref<20xf32, #tpu.memory_space<smem>>
    %c19_21 = arith.constant 19 : index
    %41 = memref.load %arg2[%c19_21] : memref<20xf32, #tpu.memory_space<smem>>
    %c0_i32 = arith.constant 0 : i32
    %c4_i32 = arith.constant 4 : i32
    %42 = arith.addi %c0_i32, %c4_i32 : i32
    %c1_i32 = arith.constant 1 : i32
    scf.for %arg6 = %c0_i32 to %42 step %c1_i32  : i32 {
      %c1_i32_23 = arith.constant 1 : i32
      %43 = arith.muli %arg6, %c1_i32_23 : i32
      %c0_i32_24 = arith.constant 0 : i32
      %44 = arith.addi %c0_i32_24, %43 : i32
      %c8_i32 = arith.constant 8 : i32
      %45 = arith.muli %44, %c8_i32 : i32
      %46 = tpu.assume_multiple %45, 8 : i32
      %47 = arith.index_cast %46 : i32 to index
      %c0_25 = arith.constant 0 : index
      %48 = vector.load %arg4[%47, %c0_25] : memref<32x512xf32, #tpu.memory_space<vmem>>, vector<8x512xf32>
      %49 = vector.broadcast %0 : f32 to vector<8x512xf32>
      %50 = arith.mulf %48, %49 : vector<8x512xf32>
      %51 = vector.broadcast %1 : f32 to vector<8x512xf32>
      %52 = arith.addf %50, %51 : vector<8x512xf32>
      %cst = arith.constant 0.000000e+00 : f32
      %53 = vector.broadcast %cst : f32 to vector<8x512xf32>
      %cst_26 = arith.constant 0.000000e+00 : f32
      %54 = vector.broadcast %cst_26 : f32 to vector<8x512xf32>
      %cst_27 = arith.constant 0.000000e+00 : f32
      %55 = vector.broadcast %cst_27 : f32 to vector<8x512xf32>
      %56 = vector.broadcast %2 : f32 to vector<8x512xf32>
      %57 = arith.addf %48, %56 : vector<8x512xf32>
      %58 = math.absf %57 : vector<8x512xf32>
      %59 = vector.broadcast %22 : f32 to vector<8x512xf32>
      %60 = arith.mulf %58, %59 : vector<8x512xf32>
      %61 = arith.addf %52, %60 : vector<8x512xf32>
      %62 = vector.broadcast %3 : f32 to vector<8x512xf32>
      %63 = arith.addf %48, %62 : vector<8x512xf32>
      %64 = math.absf %63 : vector<8x512xf32>
      %65 = vector.broadcast %23 : f32 to vector<8x512xf32>
      %66 = arith.mulf %64, %65 : vector<8x512xf32>
      %67 = arith.addf %53, %66 : vector<8x512xf32>
      %68 = vector.broadcast %4 : f32 to vector<8x512xf32>
      %69 = arith.addf %48, %68 : vector<8x512xf32>
      %70 = math.absf %69 : vector<8x512xf32>
      %71 = vector.broadcast %24 : f32 to vector<8x512xf32>
      %72 = arith.mulf %70, %71 : vector<8x512xf32>
      %73 = arith.addf %54, %72 : vector<8x512xf32>
      %74 = vector.broadcast %5 : f32 to vector<8x512xf32>
      %75 = arith.addf %48, %74 : vector<8x512xf32>
      %76 = math.absf %75 : vector<8x512xf32>
      %77 = vector.broadcast %25 : f32 to vector<8x512xf32>
      %78 = arith.mulf %76, %77 : vector<8x512xf32>
      %79 = arith.addf %55, %78 : vector<8x512xf32>
      %80 = vector.broadcast %6 : f32 to vector<8x512xf32>
      %81 = arith.addf %48, %80 : vector<8x512xf32>
      %82 = math.absf %81 : vector<8x512xf32>
      %83 = vector.broadcast %26 : f32 to vector<8x512xf32>
      %84 = arith.mulf %82, %83 : vector<8x512xf32>
      %85 = arith.addf %61, %84 : vector<8x512xf32>
      %86 = vector.broadcast %7 : f32 to vector<8x512xf32>
      %87 = arith.addf %48, %86 : vector<8x512xf32>
      %88 = math.absf %87 : vector<8x512xf32>
      %89 = vector.broadcast %27 : f32 to vector<8x512xf32>
      %90 = arith.mulf %88, %89 : vector<8x512xf32>
      %91 = arith.addf %67, %90 : vector<8x512xf32>
      %92 = vector.broadcast %8 : f32 to vector<8x512xf32>
      %93 = arith.addf %48, %92 : vector<8x512xf32>
      %94 = math.absf %93 : vector<8x512xf32>
      %95 = vector.broadcast %28 : f32 to vector<8x512xf32>
      %96 = arith.mulf %94, %95 : vector<8x512xf32>
      %97 = arith.addf %73, %96 : vector<8x512xf32>
      %98 = vector.broadcast %9 : f32 to vector<8x512xf32>
      %99 = arith.addf %48, %98 : vector<8x512xf32>
      %100 = math.absf %99 : vector<8x512xf32>
      %101 = vector.broadcast %29 : f32 to vector<8x512xf32>
      %102 = arith.mulf %100, %101 : vector<8x512xf32>
      %103 = arith.addf %79, %102 : vector<8x512xf32>
      %104 = vector.broadcast %10 : f32 to vector<8x512xf32>
      %105 = arith.addf %48, %104 : vector<8x512xf32>
      %106 = math.absf %105 : vector<8x512xf32>
      %107 = vector.broadcast %30 : f32 to vector<8x512xf32>
      %108 = arith.mulf %106, %107 : vector<8x512xf32>
      %109 = arith.addf %85, %108 : vector<8x512xf32>
      %110 = vector.broadcast %11 : f32 to vector<8x512xf32>
      %111 = arith.addf %48, %110 : vector<8x512xf32>
      %112 = math.absf %111 : vector<8x512xf32>
      %113 = vector.broadcast %31 : f32 to vector<8x512xf32>
      %114 = arith.mulf %112, %113 : vector<8x512xf32>
      %115 = arith.addf %91, %114 : vector<8x512xf32>
      %116 = vector.broadcast %12 : f32 to vector<8x512xf32>
      %117 = arith.addf %48, %116 : vector<8x512xf32>
      %118 = math.absf %117 : vector<8x512xf32>
      %119 = vector.broadcast %32 : f32 to vector<8x512xf32>
      %120 = arith.mulf %118, %119 : vector<8x512xf32>
      %121 = arith.addf %97, %120 : vector<8x512xf32>
      %122 = vector.broadcast %13 : f32 to vector<8x512xf32>
      %123 = arith.addf %48, %122 : vector<8x512xf32>
      %124 = math.absf %123 : vector<8x512xf32>
      %125 = vector.broadcast %33 : f32 to vector<8x512xf32>
      %126 = arith.mulf %124, %125 : vector<8x512xf32>
      %127 = arith.addf %103, %126 : vector<8x512xf32>
      %128 = vector.broadcast %14 : f32 to vector<8x512xf32>
      %129 = arith.addf %48, %128 : vector<8x512xf32>
      %130 = math.absf %129 : vector<8x512xf32>
      %131 = vector.broadcast %34 : f32 to vector<8x512xf32>
      %132 = arith.mulf %130, %131 : vector<8x512xf32>
      %133 = arith.addf %109, %132 : vector<8x512xf32>
      %134 = vector.broadcast %15 : f32 to vector<8x512xf32>
      %135 = arith.addf %48, %134 : vector<8x512xf32>
      %136 = math.absf %135 : vector<8x512xf32>
      %137 = vector.broadcast %35 : f32 to vector<8x512xf32>
      %138 = arith.mulf %136, %137 : vector<8x512xf32>
      %139 = arith.addf %115, %138 : vector<8x512xf32>
      %140 = vector.broadcast %16 : f32 to vector<8x512xf32>
      %141 = arith.addf %48, %140 : vector<8x512xf32>
      %142 = math.absf %141 : vector<8x512xf32>
      %143 = vector.broadcast %36 : f32 to vector<8x512xf32>
      %144 = arith.mulf %142, %143 : vector<8x512xf32>
      %145 = arith.addf %121, %144 : vector<8x512xf32>
      %146 = vector.broadcast %17 : f32 to vector<8x512xf32>
      %147 = arith.addf %48, %146 : vector<8x512xf32>
      %148 = math.absf %147 : vector<8x512xf32>
      %149 = vector.broadcast %37 : f32 to vector<8x512xf32>
      %150 = arith.mulf %148, %149 : vector<8x512xf32>
      %151 = arith.addf %127, %150 : vector<8x512xf32>
      %152 = vector.broadcast %18 : f32 to vector<8x512xf32>
      %153 = arith.addf %48, %152 : vector<8x512xf32>
      %154 = math.absf %153 : vector<8x512xf32>
      %155 = vector.broadcast %38 : f32 to vector<8x512xf32>
      %156 = arith.mulf %154, %155 : vector<8x512xf32>
      %157 = arith.addf %133, %156 : vector<8x512xf32>
      %158 = vector.broadcast %19 : f32 to vector<8x512xf32>
      %159 = arith.addf %48, %158 : vector<8x512xf32>
      %160 = math.absf %159 : vector<8x512xf32>
      %161 = vector.broadcast %39 : f32 to vector<8x512xf32>
      %162 = arith.mulf %160, %161 : vector<8x512xf32>
      %163 = arith.addf %139, %162 : vector<8x512xf32>
      %164 = vector.broadcast %20 : f32 to vector<8x512xf32>
      %165 = arith.addf %48, %164 : vector<8x512xf32>
      %166 = math.absf %165 : vector<8x512xf32>
      %167 = vector.broadcast %40 : f32 to vector<8x512xf32>
      %168 = arith.mulf %166, %167 : vector<8x512xf32>
      %169 = arith.addf %145, %168 : vector<8x512xf32>
      %170 = vector.broadcast %21 : f32 to vector<8x512xf32>
      %171 = arith.addf %48, %170 : vector<8x512xf32>
      %172 = math.absf %171 : vector<8x512xf32>
      %173 = vector.broadcast %41 : f32 to vector<8x512xf32>
      %174 = arith.mulf %172, %173 : vector<8x512xf32>
      %175 = arith.addf %151, %174 : vector<8x512xf32>
      %176 = arith.addf %157, %163 : vector<8x512xf32>
      %177 = arith.addf %169, %175 : vector<8x512xf32>
      %178 = arith.addf %176, %177 : vector<8x512xf32>
      %179 = arith.index_cast %46 : i32 to index
      %c0_28 = arith.constant 0 : index
      %180 = vector.load %arg5[%179, %c0_28] : memref<32x512xf32, #tpu.memory_space<vmem>>, vector<8x512xf32>
      tpu.vector_store %arg5[%179, %c0_28], %178 {strides = array<i32>} : memref<32x512xf32, #tpu.memory_space<vmem>>, vector<8x512xf32>,
    }
    %c4_i32_22 = arith.constant 4 : i32
    return
  }
  func.func @transform_0(%arg0: i32) -> i32 {
    %c0_i32 = arith.constant 0 : i32
    %c0_i32_0 = arith.constant 0 : i32
    return %c0_i32 : i32
  }
  func.func @transform_1(%arg0: i32) -> i32 {
    %c0_i32 = arith.constant 0 : i32
    %c0_i32_0 = arith.constant 0 : i32
    return %c0_i32 : i32
  }
  func.func @transform_2(%arg0: i32) -> i32 {
    %c0_i32 = arith.constant 0 : i32
    %c0_i32_0 = arith.constant 0 : i32
    return %c0_i32 : i32
  }
  func.func @transform_3(%arg0: i32) -> (i32, i32) {
    %c0_i32 = arith.constant 0 : i32
    %c0_i32_0 = arith.constant 0 : i32
    return %arg0, %c0_i32 : i32, i32
  }
  func.func @transform_4(%arg0: i32) -> (i32, i32) {
    %c0_i32 = arith.constant 0 : i32
    %c0_i32_0 = arith.constant 0 : i32
    return %arg0, %c0_i32 : i32, i32
  }
}

</mosaic_0001>

<llo_original>
// kernel: net_forward.1
$region0: #{net_forward.1}
  #allocation0 [shape = 'u32[]', space=smem, size = 0x4, offset = 0x4, fixed_abs, tag = 'smem constant byte address 0x4 - core index']
  #allocation1 [shape = 'u32[144,128]{1,0:T(1,128)}', space=vmem, size = 0x12000, scoped, tag = 'internal scratch']
  %s0 = inlined_call_operand.vmem [shape: f32[20], index: 0, kind: input, shape index: {}]
  %s1 = inlined_call_operand.vmem [shape: f32[20], index: 1, kind: input, shape index: {}]
  %s2 = inlined_call_operand.vmem [shape: f32[2], index: 2, kind: input, shape index: {}]
  %s3 = inlined_call_operand.vmem [shape: f32[96,512], index: 3, kind: input, shape index: {}]
  %s4 = inlined_call_operand.vmem [shape: f32[96,512], index: 4, kind: output, shape index: {}]
  %s5 = sld [smem:[#allocation0]]
  $region68: #{net_forward.1} parent=0
    _
  %s7 = ssub.s32 1, %s5
  %s8 = scalar_select 0, %s7, %s5
  $region1: #{net_forward.1} parent=0
    #allocation2 [shape = 'u8[512]{0}', space=smem, size = 0x200, scoped, tag = 'input window, operand 0, single buffered']
    #allocation3 [shape = 's32[2]{0}', space=sflag, size = 0x8, scoped, tag = 'scoped memory for net_forward.1']
    #allocation4 [shape = 'u8[512]{0}', space=smem, size = 0x200, scoped, tag = 'input window, operand 1, single buffered']
    #allocation5 [shape = 's32[1]{0}', space=sflag, size = 0x4, scoped, tag = 'scoped memory for net_forward.1']
    #allocation6 [shape = 'u8[512]{0}', space=smem, size = 0x200, scoped, tag = 'input window, operand 2, single buffered']
    %9 = vsyncpa [#allocation3], 0
    %10 = vsyncpa [#allocation5], 0
    loop: start=0, step=1, limit=5
    $region2: #{net_forward.1} parent=1 // loop_pre_header
      _
    $region3: #{net_forward.1} parent=1 // loop_header
      %s12 = sphi 0, %s16
      %p13 = scmp.ge.s32.totalorder %s12, 5
      %s20 = sphi 0, %s20
      %s22 = sphi 0, %s20
      %s23 = sphi 0, %s22
      %s37 = sphi 0, %s23
      %s41 = sphi 0, %s41
      %s43 = sphi 0, %s41
      %s44 = sphi 0, %s43
      %s58 = sphi 0, %s44
      %s62 = sphi 0, %s62
      %s64 = sphi 0, %s62
      %s65 = sphi 0, %s64
      %s79 = sphi 0, %s65
      %s85 = sphi 0, %s87
      %s88 = sphi 0, %s85
      %s89 = sphi 0, %s88
      %s105 = sphi 0, %s89
      %s111 = sphi 0, %s113
      %s114 = sphi 0, %s111
      %s115 = sphi 0, %s114
      %s131 = sphi 0, %s115
    $region4: #{net_forward.1} parent=1 // loop_header_branch
      %15 = sbr.rel (%p13) target = $region8
    $region5: #{net_forward.1} parent=1 // loop_body
      %s17 = ssub.s32 %s12, 1
      %s18 = ssub.s32 %s12, 2
      %s19 = sadd.s32 %s12, 1
      %s21 = sadd.s32 %s20, 1
      %p24 = scmp.eq.s32.totalorder %s12, 2
      %p25 = scmp.ne.s32.totalorder %s20, %s22
      %p26 = scmp.eq.s32.totalorder %s12, 0
      %p27 = por %p25, %p26
      %p28 = scmp.ne.s32.totalorder %s20, %s22
      %p29 = scmp.eq.s32.totalorder %s17, 2
      %p30 = por %p28, %p29
      %p31 = scmp.ne.s32.totalorder %s22, %s23
      %p32 = scmp.eq.s32.totalorder %s17, 0
      %p33 = por %p31, %p32
      %p34 = scmp.ne.s32.totalorder %s22, %s23
      %p35 = scmp.eq.s32.totalorder %s18, 2
      %p36 = por %p34, %p35
      %p38 = scmp.ne.s32.totalorder %s23, %s37
      %p39 = scmp.eq.s32.totalorder %s18, 0
      %p40 = por %p38, %p39
      %s42 = sadd.s32 %s41, 1
      %p45 = scmp.eq.s32.totalorder %s12, 2
      %p46 = scmp.ne.s32.totalorder %s41, %s43
      %p47 = scmp.eq.s32.totalorder %s12, 0
      %p48 = por %p46, %p47
      %p49 = scmp.ne.s32.totalorder %s41, %s43
      %p50 = scmp.eq.s32.totalorder %s17, 2
      %p51 = por %p49, %p50
      %p52 = scmp.ne.s32.totalorder %s43, %s44
      %p53 = scmp.eq.s32.totalorder %s17, 0
      %p54 = por %p52, %p53
      %p55 = scmp.ne.s32.totalorder %s43, %s44
      %p56 = scmp.eq.s32.totalorder %s18, 2
      %p57 = por %p55, %p56
      %p59 = scmp.ne.s32.totalorder %s44, %s58
      %p60 = scmp.eq.s32.totalorder %s18, 0
      %p61 = por %p59, %p60
      %s63 = sadd.s32 %s62, 1
      %p66 = scmp.eq.s32.totalorder %s12, 2
      %p67 = scmp.ne.s32.totalorder %s62, %s64
      %p68 = scmp.eq.s32.totalorder %s12, 0
      %p69 = por %p67, %p68
      %p70 = scmp.ne.s32.totalorder %s62, %s64
      %p71 = scmp.eq.s32.totalorder %s17, 2
      %p72 = por %p70, %p71
      %p73 = scmp.ne.s32.totalorder %s64, %s65
      %p74 = scmp.eq.s32.totalorder %s17, 0
      %p75 = por %p73, %p74
      %p76 = scmp.ne.s32.totalorder %s64, %s65
      %p77 = scmp.eq.s32.totalorder %s18, 2
      %p78 = por %p76, %p77
      %p80 = scmp.ne.s32.totalorder %s65, %s79
      %p81 = scmp.eq.s32.totalorder %s18, 0
      %p82 = por %p80, %p81
      %s83 = ssub.s32 %s12, %s19
      %p84 = scmp.eq.s32.totalorder %s83, 0
      %s86 = sadd.s32 %s85, 1
      %s87 = scalar_select %p84, %s85, %s86
      %p90 = pneg %p84
      %p91 = scmp.eq.s32.totalorder %s12, 2
      %p92 = por %p90, %p91
      %p93 = scmp.ne.s32.totalorder %s85, %s88
      %p94 = scmp.eq.s32.totalorder %s12, 0
      %p95 = por %p93, %p94
      %p96 = scmp.ne.s32.totalorder %s85, %s88
      %p97 = scmp.eq.s32.totalorder %s17, 2
      %p98 = por %p96, %p97
      %p99 = scmp.ne.s32.totalorder %s88, %s89
      %p100 = scmp.eq.s32.totalorder %s17, 0
      %p101 = por %p99, %p100
      %p102 = scmp.ne.s32.totalorder %s88, %s89
      %p103 = scmp.eq.s32.totalorder %s18, 2
      %p104 = por %p102, %p103
      %p106 = scmp.ne.s32.totalorder %s89, %s105
      %p107 = scmp.eq.s32.totalorder %s18, 0
      %p108 = por %p106, %p107
      %s109 = ssub.s32 %s12, %s19
      %p110 = scmp.eq.s32.totalorder %s109, 0
      %s112 = sadd.s32 %s111, 1
      %s113 = scalar_select %p110, %s111, %s112
      %p116 = pneg %p110
      %p117 = scmp.eq.s32.totalorder %s12, 2
      %p118 = por %p116, %p117
      %p119 = scmp.ne.s32.totalorder %s111, %s114
      %p120 = scmp.eq.s32.totalorder %s12, 0
      %p121 = por %p119, %p120
      %p122 = scmp.ne.s32.totalorder %s111, %s114
      %p123 = scmp.eq.s32.totalorder %s17, 2
      %p124 = por %p122, %p123
      %p125 = scmp.ne.s32.totalorder %s114, %s115
      %p126 = scmp.eq.s32.totalorder %s17, 0
      %p127 = por %p125, %p126
      %p128 = scmp.ne.s32.totalorder %s114, %s115
      %p129 = scmp.eq.s32.totalorder %s18, 2
      %p130 = por %p128, %p129
      %p132 = scmp.ne.s32.totalorder %s115, %s131
      %p133 = scmp.eq.s32.totalorder %s18, 0
      %p134 = por %p132, %p133
      %p135 = scmp.le.s32.totalorder 1, %s12
      %p136 = scmp.lt.s32.totalorder %s12, 4
      %p137 = pnand %p135, %p136
      %p138 = pneg %p137
      // Predicated region
      $region9: #{net_forward.1} parent=5 // pred_check
        _
      $region10: #{net_forward.1} parent=5 // pred_check_branch
        %140 = sbr.rel (%p137) target = $region12
      $region11: #{net_forward.1} parent=5 // pred_region
        %s141 = ssub.s32 %s12, 1
        // Predicated region
        $region13: #{net_forward.1} parent=11 // pred_check
          %p142 = pneg %p33
        $region14: #{net_forward.1} parent=11 // pred_check_branch
          %144 = sbr.rel (%p142) target = $region16
        $region15: #{net_forward.1} parent=11 // pred_region
          %s146 = ssub.s32 16, 16
          %147 = vsyncadd [#allocation3], %s146
          %s149 = sshll.u32 %s0, 4
          %s150 = int_to_ptr.vmem [resolvable:$true] %s149
          %152 = dma.vmem_to_smem %s150, 16, [#allocation2], [#allocation3]
        $region16: #{net_forward.1} parent=11 // pred_fallthru
          _
        // Predicated region
        $region17: #{net_forward.1} parent=11 // pred_check
          %p153 = pneg %p54
        $region18: #{net_forward.1} parent=11 // pred_check_branch
          %155 = sbr.rel (%p153) target = $region20
        $region19: #{net_forward.1} parent=11 // pred_region
          %s157 = ssub.s32 16, 16
          %158 = vsyncadd [#allocation5], %s157
          %s160 = sshll.u32 %s1, 4
          %s161 = int_to_ptr.vmem [resolvable:$true] %s160
          %163 = dma.vmem_to_smem %s161, 16, [#allocation4], [#allocation5]
        $region20: #{net_forward.1} parent=11 // pred_fallthru
          _
        // Predicated region
        $region21: #{net_forward.1} parent=11 // pred_check
          %p164 = pneg %p75
        $region22: #{net_forward.1} parent=11 // pred_check_branch
          %166 = sbr.rel (%p164) target = $region24
        $region23: #{net_forward.1} parent=11 // pred_region
          %s168 = ssub.s32 16, 16
          %169 = vsyncadd [#allocation5], %s168
          %s171 = sshll.u32 %s2, 4
          %s172 = int_to_ptr.vmem [resolvable:$true] %s171
          %174 = dma.vmem_to_smem %s172, 16, [#allocation6], [#allocation5]
        $region24: #{net_forward.1} parent=11 // pred_fallthru
          _
      $region12: #{net_forward.1} parent=5 // pred_fallthru
        _
      %p175 = scmp.lt.s32.totalorder %s12, 3
      // Predicated region
      $region25: #{net_forward.1} parent=5 // pred_check
        %p176 = pneg %p175
      $region26: #{net_forward.1} parent=5 // pred_check_branch
        %178 = sbr.rel (%p176) target = $region28
      $region27: #{net_forward.1} parent=5 // pred_region
        // Predicated region
        $region29: #{net_forward.1} parent=27 // pred_check
          %p179 = pneg %p95
        $region30: #{net_forward.1} parent=27 // pred_check_branch
          %181 = sbr.rel (%p179) target = $region32
        $region31: #{net_forward.1} parent=27 // pred_region
          %s182 = smul.u32 4, %s12
          %p183 = scmp.lt.s32.totalorder %s182, 11
          %s184 = scalar_select %p183, %s182, 11
          %s185 = smul.addr %s184, 4
          %s186 = smul.addr %s185, 8
          %s187 = scalar_lea.vmem %s3, %s186
          %s188 = smul.u32 4, %s12
        $region32: #{net_forward.1} parent=27 // pred_fallthru
          _
      $region28: #{net_forward.1} parent=5 // pred_fallthru
        _
      %p189 = scmp.le.s32.totalorder 1, %s12
      %p190 = scmp.lt.s32.totalorder %s12, 4
      %p191 = pnand %p189, %p190
      %p192 = pneg %p191
      // Predicated region
      $region33: #{net_forward.1} parent=5 // pred_check
        _
      $region34: #{net_forward.1} parent=5 // pred_check_branch
        %194 = sbr.rel (%p191) target = $region36
      $region35: #{net_forward.1} parent=5 // pred_region
        %s195 = ssub.s32 %s12, 1
        // Predicated region
        $region37: #{net_forward.1} parent=35 // pred_check
          %p196 = pneg %p33
        $region38: #{net_forward.1} parent=35 // pred_check_branch
          %198 = sbr.rel (%p196) target = $region40
        $region39: #{net_forward.1} parent=35 // pred_region
          %199 = dma.done [#allocation3], 16
        $region40: #{net_forward.1} parent=35 // pred_fallthru
          _
        // Predicated region
        $region41: #{net_forward.1} parent=35 // pred_check
          %p200 = pneg %p54
        $region42: #{net_forward.1} parent=35 // pred_check_branch
          %202 = sbr.rel (%p200) target = $region44
        $region43: #{net_forward.1} parent=35 // pred_region
          %203 = dma.done [#allocation5], 16
        $region44: #{net_forward.1} parent=35 // pred_fallthru
          _
        // Predicated region
        $region45: #{net_forward.1} parent=35 // pred_check
          %p204 = pneg %p75
        $region46: #{net_forward.1} parent=35 // pred_check_branch
          %206 = sbr.rel (%p204) target = $region48
        $region47: #{net_forward.1} parent=35 // pred_region
          %207 = dma.done [#allocation5], 16
        $region48: #{net_forward.1} parent=35 // pred_fallthru
          _
        %208 = sfence
        %p209 = pneg %p33
        %p210 = pneg %p30
        %p211 = pneg %p54
        %p212 = pneg %p51
        %p213 = pneg %p75
        %p214 = pneg %p72
        %s215 = smul.u32 4, %s17
        %p216 = scmp.lt.s32.totalorder %s215, 11
        %s217 = scalar_select %p216, %s215, 11
        %s218 = smul.addr %s217, 4
        %s219 = smul.addr %s218, 8
        %s220 = scalar_lea.vmem %s3, %s219
        %p221 = pneg %p101
        %p222 = pneg %p98
        %p223 = pneg %p127
        %p224 = pneg %p124
        %s225 = smul.u32 4, %s17
        %p226 = scmp.lt.s32.totalorder %s225, 11
        %s227 = scalar_select %p226, %s225, 11
        %s228 = smul.addr %s227, 4
        %s229 = smul.addr %s228, 8
        %s230 = scalar_lea.vmem %s4, %s229
        %s231 = smul.u32 4, %s17
        %p232 = scmp.lt.s32.totalorder %s231, 11
        %s233 = scalar_select %p232, %s231, 11
        %s234 = smul.addr %s233, 4
        %s235 = smul.addr %s234, 8
        %s236 = scalar_lea.vmem %s3, %s235
        %s237 = smul.u32 4, %s17
        %s238 = smul.u32 4, %s17
        %p239 = scmp.lt.s32.totalorder %s238, 11
        %s240 = scalar_select %p239, %s238, 11
        %s241 = smul.addr %s240, 4
        %s242 = smul.addr %s241, 8
        %s243 = scalar_lea.vmem %s4, %s242
        %s244 = smul.u32 4, %s17
        %s245 = sld [smem:[#allocation6]]
        %s246 = sld [smem:[#allocation6 + $0x1]]
        %s247 = sld [smem:[#allocation2]]
        %s248 = sld [smem:[#allocation2 + $0x1]]
        %s249 = sld [smem:[#allocation2 + $0x2]]
        %s250 = sld [smem:[#allocation2 + $0x3]]
        %s251 = sld [smem:[#allocation2 + $0x4]]
        %s252 = sld [smem:[#allocation2 + $0x5]]
        %s253 = sld [smem:[#allocation2 + $0x6]]
        %s254 = sld [smem:[#allocation2 + $0x7]]
        %s255 = sld [smem:[#allocation2 + $0x8]]
        %s256 = sld [smem:[#allocation2 + $0x9]]
        %s257 = sld [smem:[#allocation2 + $0xa]]
        %s258 = sld [smem:[#allocation2 + $0xb]]
        %s259 = sld [smem:[#allocation2 + $0xc]]
        %s260 = sld [smem:[#allocation2 + $0xd]]
        %s261 = sld [smem:[#allocation2 + $0xe]]
        %s262 = sld [smem:[#allocation2 + $0xf]]
        %s263 = sld [smem:[#allocation2 + $0x10]]
        %s264 = sld [smem:[#allocation2 + $0x11]]
        %s265 = sld [smem:[#allocation2 + $0x12]]
        %s266 = sld [smem:[#allocation2 + $0x13]]
        %s267 = sld [smem:[#allocation4]]
        %s268 = sld [smem:[#allocation4 + $0x1]]
        %s269 = sld [smem:[#allocation4 + $0x2]]
        %s270 = sld [smem:[#allocation4 + $0x3]]
        %s271 = sld [smem:[#allocation4 + $0x4]]
        %s272 = sld [smem:[#allocation4 + $0x5]]
        %s273 = sld [smem:[#allocation4 + $0x6]]
        %s274 = sld [smem:[#allocation4 + $0x7]]
        %s275 = sld [smem:[#allocation4 + $0x8]]
        %s276 = sld [smem:[#allocation4 + $0x9]]
        %s277 = sld [smem:[#allocation4 + $0xa]]
        %s278 = sld [smem:[#allocation4 + $0xb]]
        %s279 = sld [smem:[#allocation4 + $0xc]]
        %s280 = sld [smem:[#allocation4 + $0xd]]
        %s281 = sld [smem:[#allocation4 + $0xe]]
        %s282 = sld [smem:[#allocation4 + $0xf]]
        %s283 = sld [smem:[#allocation4 + $0x10]]
        %s284 = sld [smem:[#allocation4 + $0x11]]
        %s285 = sld [smem:[#allocation4 + $0x12]]
        %s286 = sld [smem:[#allocation4 + $0x13]]
        loop: start=0, step=1, limit=4
        $region49: #{net_forward.1} parent=35 // loop_pre_header
          _
        $region50: #{net_forward.1} parent=35 // loop_header
          %s288 = sphi 0, %s292
          %p289 = scmp.ge.s32.totalorder %s288, 4
        $region51: #{net_forward.1} parent=35 // loop_header_branch
          %291 = sbr.rel (%p289) target = $region55
        $region52: #{net_forward.1} parent=35 // loop_body
          %s293 = smul.u32 %s288, 8
          %s294 = sshra.s32 %s293, 3
          %s295 = sand.u32 %s293, 7
          %s296 = smul.u32 %s294, 4
          %s297 = smul.addr %s296, 8
          %s298 = scalar_lea.vmem %s236, %s297
          %v299 = vld [vmem:[%s298] sm:$0xff]
          %v300 = vld [vmem:[%s298 + $0x8] sm:$0xff]
          %v301 = vld [vmem:[%s298 + $0x10] sm:$0xff]
          %v302 = vld [vmem:[%s298 + $0x18] sm:$0xff]
          %v303 = vstv %s245
          %v304 = vmul.f32 %v299, %v303
          %v305 = vmul.f32 %v300, %v303
          %v306 = vmul.f32 %v301, %v303
          %v307 = vmul.f32 %v302, %v303
          %v308 = vstv %s246
          %v309 = vadd.f32 %v304, %v308
          %v310 = vadd.f32 %v305, %v308
          %v311 = vadd.f32 %v306, %v308
          %v312 = vadd.f32 %v307, %v308
          %v313 = vstv %s247
          %v314 = vadd.f32 %v299, %v313
          %v315 = vadd.f32 %v300, %v313
          %v316 = vadd.f32 %v301, %v313
          %v317 = vadd.f32 %v302, %v313
          %v318 = vand.u32 2147483647, %v314
          %v319 = vand.u32 2147483647, %v315
          %v320 = vand.u32 2147483647, %v316
          %v321 = vand.u32 2147483647, %v317
          %v322 = vstv %s267
          %v323 = vmul.f32 %v318, %v322
          %v324 = vmul.f32 %v319, %v322
          %v325 = vmul.f32 %v320, %v322
          %v326 = vmul.f32 %v321, %v322
          %v327 = vadd.f32 %v309, %v323
          %v328 = vadd.f32 %v310, %v324
          %v329 = vadd.f32 %v311, %v325
          %v330 = vadd.f32 %v312, %v326
          %v331 = vstv %s248
          %v332 = vadd.f32 %v299, %v331
          %v333 = vadd.f32 %v300, %v331
          %v334 = vadd.f32 %v301, %v331
          %v335 = vadd.f32 %v302, %v331
          %v336 = vand.u32 2147483647, %v332
          %v337 = vand.u32 2147483647, %v333
          %v338 = vand.u32 2147483647, %v334
          %v339 = vand.u32 2147483647, %v335
          %v340 = vstv %s268
          %v341 = vmul.f32 %v336, %v340
          %v342 = vmul.f32 %v337, %v340
          %v343 = vmul.f32 %v338, %v340
          %v344 = vmul.f32 %v339, %v340
          %v345 = vadd.f32 %v341, 0.0
          %v346 = vadd.f32 %v342, 0.0
          %v347 = vadd.f32 %v343, 0.0
          %v348 = vadd.f32 %v344, 0.0
          %v349 = vstv %s249
          %v350 = vadd.f32 %v299, %v349
          %v351 = vadd.f32 %v300, %v349
          %v352 = vadd.f32 %v301, %v349
          %v353 = vadd.f32 %v302, %v349
          %v354 = vand.u32 2147483647, %v350
          %v355 = vand.u32 2147483647, %v351
          %v356 = vand.u32 2147483647, %v352
          %v357 = vand.u32 2147483647, %v353
          %v358 = vstv %s269
          %v359 = vmul.f32 %v354, %v358
          %v360 = vmul.f32 %v355, %v358
          %v361 = vmul.f32 %v356, %v358
          %v362 = vmul.f32 %v357, %v358
          %v363 = vadd.f32 %v359, 0.0
          %v364 = vadd.f32 %v360, 0.0
          %v365 = vadd.f32 %v361, 0.0
          %v366 = vadd.f32 %v362, 0.0
          %v367 = vstv %s250
          %v368 = vadd.f32 %v299, %v367
          %v369 = vadd.f32 %v300, %v367
          %v370 = vadd.f32 %v301, %v367
          %v371 = vadd.f32 %v302, %v367
          %v372 = vand.u32 2147483647, %v368
          %v373 = vand.u32 2147483647, %v369
          %v374 = vand.u32 2147483647, %v370
          %v375 = vand.u32 2147483647, %v371
          %v376 = vstv %s270
          %v377 = vmul.f32 %v372, %v376
          %v378 = vmul.f32 %v373, %v376
          %v379 = vmul.f32 %v374, %v376
          %v380 = vmul.f32 %v375, %v376
          %v381 = vadd.f32 %v377, 0.0
          %v382 = vadd.f32 %v378, 0.0
          %v383 = vadd.f32 %v379, 0.0
          %v384 = vadd.f32 %v380, 0.0
          %v385 = vstv %s251
          %v386 = vadd.f32 %v299, %v385
          %v387 = vadd.f32 %v300, %v385
          %v388 = vadd.f32 %v301, %v385
          %v389 = vadd.f32 %v302, %v385
          %v390 = vand.u32 2147483647, %v386
          %v391 = vand.u32 2147483647, %v387
          %v392 = vand.u32 2147483647, %v388
          %v393 = vand.u32 2147483647, %v389
          %v394 = vstv %s271
          %v395 = vmul.f32 %v390, %v394
          %v396 = vmul.f32 %v391, %v394
          %v397 = vmul.f32 %v392, %v394
          %v398 = vmul.f32 %v393, %v394
          %v399 = vadd.f32 %v327, %v395
          %v400 = vadd.f32 %v328, %v396
          %v401 = vadd.f32 %v329, %v397
          %v402 = vadd.f32 %v330, %v398
          %v403 = vstv %s252
          %v404 = vadd.f32 %v299, %v403
          %v405 = vadd.f32 %v300, %v403
          %v406 = vadd.f32 %v301, %v403
          %v407 = vadd.f32 %v302, %v403
          %v408 = vand.u32 2147483647, %v404
          %v409 = vand.u32 2147483647, %v405
          %v410 = vand.u32 2147483647, %v406
          %v411 = vand.u32 2147483647, %v407
          %v412 = vstv %s272
          %v413 = vmul.f32 %v408, %v412
          %v414 = vmul.f32 %v409, %v412
          %v415 = vmul.f32 %v410, %v412
          %v416 = vmul.f32 %v411, %v412
          %v417 = vadd.f32 %v345, %v413
          %v418 = vadd.f32 %v346, %v414
          %v419 = vadd.f32 %v347, %v415
          %v420 = vadd.f32 %v348, %v416
          %v421 = vstv %s253
          %v422 = vadd.f32 %v299, %v421
          %v423 = vadd.f32 %v300, %v421
          %v424 = vadd.f32 %v301, %v421
          %v425 = vadd.f32 %v302, %v421
          %v426 = vand.u32 2147483647, %v422
          %v427 = vand.u32 2147483647, %v423
          %v428 = vand.u32 2147483647, %v424
          %v429 = vand.u32 2147483647, %v425
          %v430 = vstv %s273
          %v431 = vmul.f32 %v426, %v430
          %v432 = vmul.f32 %v427, %v430
          %v433 = vmul.f32 %v428, %v430
          %v434 = vmul.f32 %v429, %v430
          %v435 = vadd.f32 %v363, %v431
          %v436 = vadd.f32 %v364, %v432
          %v437 = vadd.f32 %v365, %v433
          %v438 = vadd.f32 %v366, %v434
          %v439 = vstv %s254
          %v440 = vadd.f32 %v299, %v439
          %v441 = vadd.f32 %v300, %v439
          %v442 = vadd.f32 %v301, %v439
          %v443 = vadd.f32 %v302, %v439
          %v444 = vand.u32 2147483647, %v440
          %v445 = vand.u32 2147483647, %v441
          %v446 = vand.u32 2147483647, %v442
          %v447 = vand.u32 2147483647, %v443
          %v448 = vstv %s274
          %v449 = vmul.f32 %v444, %v448
          %v450 = vmul.f32 %v445, %v448
          %v451 = vmul.f32 %v446, %v448
          %v452 = vmul.f32 %v447, %v448
          %v453 = vadd.f32 %v381, %v449
          %v454 = vadd.f32 %v382, %v450
          %v455 = vadd.f32 %v383, %v451
          %v456 = vadd.f32 %v384, %v452
          %v457 = vstv %s255
          %v458 = vadd.f32 %v299, %v457
          %v459 = vadd.f32 %v300, %v457
          %v460 = vadd.f32 %v301, %v457
          %v461 = vadd.f32 %v302, %v457
          %v462 = vand.u32 2147483647, %v458
          %v463 = vand.u32 2147483647, %v459
          %v464 = vand.u32 2147483647, %v460
          %v465 = vand.u32 2147483647, %v461
          %v466 = vstv %s275
          %v467 = vmul.f32 %v462, %v466
          %v468 = vmul.f32 %v463, %v466
          %v469 = vmul.f32 %v464, %v466
          %v470 = vmul.f32 %v465, %v466
          %v471 = vadd.f32 %v399, %v467
          %v472 = vadd.f32 %v400, %v468
          %v473 = vadd.f32 %v401, %v469
          %v474 = vadd.f32 %v402, %v470
          %v475 = vstv %s256
          %v476 = vadd.f32 %v299, %v475
          %v477 = vadd.f32 %v300, %v475
          %v478 = vadd.f32 %v301, %v475
          %v479 = vadd.f32 %v302, %v475
          %v480 = vand.u32 2147483647, %v476
          %v481 = vand.u32 2147483647, %v477
          %v482 = vand.u32 2147483647, %v478
          %v483 = vand.u32 2147483647, %v479
          %v484 = vstv %s276
          %v485 = vmul.f32 %v480, %v484
          %v486 = vmul.f32 %v481, %v484
          %v487 = vmul.f32 %v482, %v484
          %v488 = vmul.f32 %v483, %v484
          %v489 = vadd.f32 %v417, %v485
          %v490 = vadd.f32 %v418, %v486
          %v491 = vadd.f32 %v419, %v487
          %v492 = vadd.f32 %v420, %v488
          %v493 = vstv %s257
          %v494 = vadd.f32 %v299, %v493
          %v495 = vadd.f32 %v300, %v493
          %v496 = vadd.f32 %v301, %v493
          %v497 = vadd.f32 %v302, %v493
          %v498 = vand.u32 2147483647, %v494
          %v499 = vand.u32 2147483647, %v495
          %v500 = vand.u32 2147483647, %v496
          %v501 = vand.u32 2147483647, %v497
          %v502 = vstv %s277
          %v503 = vmul.f32 %v498, %v502
          %v504 = vmul.f32 %v499, %v502
          %v505 = vmul.f32 %v500, %v502
          %v506 = vmul.f32 %v501, %v502
          %v507 = vadd.f32 %v435, %v503
          %v508 = vadd.f32 %v436, %v504
          %v509 = vadd.f32 %v437, %v505
          %v510 = vadd.f32 %v438, %v506
          %v511 = vstv %s258
          %v512 = vadd.f32 %v299, %v511
          %v513 = vadd.f32 %v300, %v511
          %v514 = vadd.f32 %v301, %v511
          %v515 = vadd.f32 %v302, %v511
          %v516 = vand.u32 2147483647, %v512
          %v517 = vand.u32 2147483647, %v513
          %v518 = vand.u32 2147483647, %v514
          %v519 = vand.u32 2147483647, %v515
          %v520 = vstv %s278
          %v521 = vmul.f32 %v516, %v520
          %v522 = vmul.f32 %v517, %v520
          %v523 = vmul.f32 %v518, %v520
          %v524 = vmul.f32 %v519, %v520
          %v525 = vadd.f32 %v453, %v521
          %v526 = vadd.f32 %v454, %v522
          %v527 = vadd.f32 %v455, %v523
          %v528 = vadd.f32 %v456, %v524
          %v529 = vstv %s259
          %v530 = vadd.f32 %v299, %v529
          %v531 = vadd.f32 %v300, %v529
          %v532 = vadd.f32 %v301, %v529
          %v533 = vadd.f32 %v302, %v529
          %v534 = vand.u32 2147483647, %v530
          %v535 = vand.u32 2147483647, %v531
          %v536 = vand.u32 2147483647, %v532
          %v537 = vand.u32 2147483647, %v533
          %v538 = vstv %s279
          %v539 = vmul.f32 %v534, %v538
          %v540 = vmul.f32 %v535, %v538
          %v541 = vmul.f32 %v536, %v538
          %v542 = vmul.f32 %v537, %v538
          %v543 = vadd.f32 %v471, %v539
          %v544 = vadd.f32 %v472, %v540
          %v545 = vadd.f32 %v473, %v541
          %v546 = vadd.f32 %v474, %v542
          %v547 = vstv %s260
          %v548 = vadd.f32 %v299, %v547
          %v549 = vadd.f32 %v300, %v547
          %v550 = vadd.f32 %v301, %v547
          %v551 = vadd.f32 %v302, %v547
          %v552 = vand.u32 2147483647, %v548
          %v553 = vand.u32 2147483647, %v549
          %v554 = vand.u32 2147483647, %v550
          %v555 = vand.u32 2147483647, %v551
          %v556 = vstv %s280
          %v557 = vmul.f32 %v552, %v556
          %v558 = vmul.f32 %v553, %v556
          %v559 = vmul.f32 %v554, %v556
          %v560 = vmul.f32 %v555, %v556
          %v561 = vadd.f32 %v489, %v557
          %v562 = vadd.f32 %v490, %v558
          %v563 = vadd.f32 %v491, %v559
          %v564 = vadd.f32 %v492, %v560
          %v565 = vstv %s261
          %v566 = vadd.f32 %v299, %v565
          %v567 = vadd.f32 %v300, %v565
          %v568 = vadd.f32 %v301, %v565
          %v569 = vadd.f32 %v302, %v565
          %v570 = vand.u32 2147483647, %v566
          %v571 = vand.u32 2147483647, %v567
          %v572 = vand.u32 2147483647, %v568
          %v573 = vand.u32 2147483647, %v569
          %v574 = vstv %s281
          %v575 = vmul.f32 %v570, %v574
          %v576 = vmul.f32 %v571, %v574
          %v577 = vmul.f32 %v572, %v574
          %v578 = vmul.f32 %v573, %v574
          %v579 = vadd.f32 %v507, %v575
          %v580 = vadd.f32 %v508, %v576
          %v581 = vadd.f32 %v509, %v577
          %v582 = vadd.f32 %v510, %v578
          %v583 = vstv %s262
          %v584 = vadd.f32 %v299, %v583
          %v585 = vadd.f32 %v300, %v583
          %v586 = vadd.f32 %v301, %v583
          %v587 = vadd.f32 %v302, %v583
          %v588 = vand.u32 2147483647, %v584
          %v589 = vand.u32 2147483647, %v585
          %v590 = vand.u32 2147483647, %v586
          %v591 = vand.u32 2147483647, %v587
          %v592 = vstv %s282
          %v593 = vmul.f32 %v588, %v592
          %v594 = vmul.f32 %v589, %v592
          %v595 = vmul.f32 %v590, %v592
          %v596 = vmul.f32 %v591, %v592
          %v597 = vadd.f32 %v525, %v593
          %v598 = vadd.f32 %v526, %v594
          %v599 = vadd.f32 %v527, %v595
          %v600 = vadd.f32 %v528, %v596
          %v601 = vstv %s263
          %v602 = vadd.f32 %v299, %v601
          %v603 = vadd.f32 %v300, %v601
          %v604 = vadd.f32 %v301, %v601
          %v605 = vadd.f32 %v302, %v601
          %v606 = vand.u32 2147483647, %v602
          %v607 = vand.u32 2147483647, %v603
          %v608 = vand.u32 2147483647, %v604
          %v609 = vand.u32 2147483647, %v605
          %v610 = vstv %s283
          %v611 = vmul.f32 %v606, %v610
          %v612 = vmul.f32 %v607, %v610
          %v613 = vmul.f32 %v608, %v610
          %v614 = vmul.f32 %v609, %v610
          %v615 = vadd.f32 %v543, %v611
          %v616 = vadd.f32 %v544, %v612
          %v617 = vadd.f32 %v545, %v613
          %v618 = vadd.f32 %v546, %v614
          %v619 = vstv %s264
          %v620 = vadd.f32 %v299, %v619
          %v621 = vadd.f32 %v300, %v619
          %v622 = vadd.f32 %v301, %v619
          %v623 = vadd.f32 %v302, %v619
          %v624 = vand.u32 2147483647, %v620
          %v625 = vand.u32 2147483647, %v621
          %v626 = vand.u32 2147483647, %v622
          %v627 = vand.u32 2147483647, %v623
          %v628 = vstv %s284
          %v629 = vmul.f32 %v624, %v628
          %v630 = vmul.f32 %v625, %v628
          %v631 = vmul.f32 %v626, %v628
          %v632 = vmul.f32 %v627, %v628
          %v633 = vadd.f32 %v561, %v629
          %v634 = vadd.f32 %v562, %v630
          %v635 = vadd.f32 %v563, %v631
          %v636 = vadd.f32 %v564, %v632
          %v637 = vstv %s265
          %v638 = vadd.f32 %v299, %v637
          %v639 = vadd.f32 %v300, %v637
          %v640 = vadd.f32 %v301, %v637
          %v641 = vadd.f32 %v302, %v637
          %v642 = vand.u32 2147483647, %v638
          %v643 = vand.u32 2147483647, %v639
          %v644 = vand.u32 2147483647, %v640
          %v645 = vand.u32 2147483647, %v641
          %v646 = vstv %s285
          %v647 = vmul.f32 %v642, %v646
          %v648 = vmul.f32 %v643, %v646
          %v649 = vmul.f32 %v644, %v646
          %v650 = vmul.f32 %v645, %v646
          %v651 = vadd.f32 %v579, %v647
          %v652 = vadd.f32 %v580, %v648
          %v653 = vadd.f32 %v581, %v649
          %v654 = vadd.f32 %v582, %v650
          %v655 = vstv %s266
          %v656 = vadd.f32 %v299, %v655
          %v657 = vadd.f32 %v300, %v655
          %v658 = vadd.f32 %v301, %v655
          %v659 = vadd.f32 %v302, %v655
          %v660 = vand.u32 2147483647, %v656
          %v661 = vand.u32 2147483647, %v657
          %v662 = vand.u32 2147483647, %v658
          %v663 = vand.u32 2147483647, %v659
          %v664 = vstv %s286
          %v665 = vmul.f32 %v660, %v664
          %v666 = vmul.f32 %v661, %v664
          %v667 = vmul.f32 %v662, %v664
          %v668 = vmul.f32 %v663, %v664
          %v669 = vadd.f32 %v597, %v665
          %v670 = vadd.f32 %v598, %v666
          %v671 = vadd.f32 %v599, %v667
          %v672 = vadd.f32 %v600, %v668
          %v673 = vadd.f32 %v615, %v633
          %v674 = vadd.f32 %v616, %v634
          %v675 = vadd.f32 %v617, %v635
          %v676 = vadd.f32 %v618, %v636
          %v677 = vadd.f32 %v651, %v669
          %v678 = vadd.f32 %v652, %v670
          %v679 = vadd.f32 %v653, %v671
          %v680 = vadd.f32 %v654, %v672
          %v681 = vadd.f32 %v673, %v677
          %v682 = vadd.f32 %v674, %v678
          %v683 = vadd.f32 %v675, %v679
          %v684 = vadd.f32 %v676, %v680
          %s685 = smul.addr %s296, 8
          %s686 = scalar_lea.vmem %s243, %s685
          %687 = vst [vmem:[%s686] sm:$0xff] %v681
          %688 = vst [vmem:[%s686 + $0x8] sm:$0xff] %v682
          %689 = vst [vmem:[%s686 + $0x10] sm:$0xff] %v683
          %690 = vst [vmem:[%s686 + $0x18] sm:$0xff] %v684
        $region53: #{net_forward.1} parent=35 // loop_footer
          %s292 = sadd.s32 1, %s288
        $region54: #{net_forward.1} parent=35 // loop_footer_branch
          %287 = sbr.rel target = $region50
        $region55: #{net_forward.1} parent=35 // loop_exit
          _
        %s691 = smul.u32 4, %s17
        %p692 = scmp.lt.s32.totalorder %s691, 11
        %s693 = scalar_select %p692, %s691, 11
        %s694 = smul.addr %s693, 4
        %s695 = smul.addr %s694, 8
        %s696 = scalar_lea.vmem %s4, %s695
        // Predicated region
        $region56: #{net_forward.1} parent=35 // pred_check
          %p697 = pneg %p124
        $region57: #{net_forward.1} parent=35 // pred_check_branch
          %699 = sbr.rel (%p697) target = $region59
        $region58: #{net_forward.1} parent=35 // pred_region
          %s700 = smul.u32 4, %s17
        $region59: #{net_forward.1} parent=35 // pred_fallthru
          _
      $region36: #{net_forward.1} parent=5 // pred_fallthru
        _
      %p701 = scmp.le.s32.totalorder 2, %s12
      // Predicated region
      $region60: #{net_forward.1} parent=5 // pred_check
        %p702 = pneg %p701
      $region61: #{net_forward.1} parent=5 // pred_check_branch
        %704 = sbr.rel (%p702) target = $region63
      $region62: #{net_forward.1} parent=5 // pred_region
        %s705 = ssub.s32 %s12, 2
        // Predicated region
        $region64: #{net_forward.1} parent=62 // pred_check
          %p706 = pneg %p130
        $region65: #{net_forward.1} parent=62 // pred_check_branch
          %708 = sbr.rel (%p706) target = $region67
        $region66: #{net_forward.1} parent=62 // pred_region
          %s709 = smul.u32 4, %s18
          %p710 = scmp.lt.s32.totalorder %s709, 11
          %s711 = scalar_select %p710, %s709, 11
          %s712 = smul.addr %s711, 4
          %s713 = smul.addr %s712, 8
          %s714 = scalar_lea.vmem %s4, %s713
        $region67: #{net_forward.1} parent=62 // pred_fallthru
          _
      $region63: #{net_forward.1} parent=5 // pred_fallthru
        _
    $region6: #{net_forward.1} parent=1 // loop_footer
      %s16 = sadd.s32 1, %s12
    $region7: #{net_forward.1} parent=1 // loop_footer_branch
      %11 = sbr.rel target = $region3
    $region8: #{net_forward.1} parent=1 // loop_exit
      _
    %715 = vsyncpa [#allocation3], 1
    %s716 = scalar_lea.sflag [#allocation3], 1
    %717 = vsyncpa %s716, 1
    %718 = vsyncpa [#allocation5], 1

</llo_original>
